<compile_context>
chip_gen: v6e
topology: v6e:2x2x1
jax: 0.10.0
libtpu: 0.0.40
codegen_flags: <defaults>
</compile_context>

<pallas_src>
import math

import jax
import jax.numpy as jnp
from jax.experimental import pallas as pl
from jax.experimental.pallas import tpu as pltpu

_LANE = 128


def _add_weighted_kernel(params_ref, s1_ref, s2_ref, o_ref):
    # params_ref lives in SMEM: [alpha, beta, gamma] f32 scalars (runtime
    # values, so changing the weights never triggers a recompile).
    alpha = params_ref[0]
    beta = params_ref[1]
    gamma = params_ref[2]
    # Compute in f32 (VPU has huge slack vs the DMA), cast on store so
    # integer / low-precision outputs are handled explicitly.
    x = s1_ref[...].astype(jnp.float32)
    y = s2_ref[...].astype(jnp.float32)
    o_ref[...] = (x * alpha + y * beta + gamma).astype(o_ref.dtype)


def _packed_sublanes(dtype) -> int:
    # Rows of one packed (sublane, lane) vreg tile: 8 for 4-byte dtypes,
    # 16 for 2-byte, 32 for 1-byte.
    itemsize = jnp.dtype(dtype).itemsize
    if itemsize >= 4:
        return 8
    return 32 // itemsize


def _round_up(x: int, m: int) -> int:
    return -(-x // m) * m


def _vmem_capacity_bytes() -> int:
    try:
        cap = getattr(pltpu.get_tpu_info(), "vmem_capacity_bytes", None)
        if cap:
            return int(cap)
    except Exception:
        pass
    return 64 << 20  # conservative fallback: assume v7x-sized (64 MiB) VMEM


def _select_tiling(rows: int, bytes_per_row: int, sub: int,
                   target_block_bytes: int):
    """Pick (tile_rows, n_steps) for a (rows, 128) slab."""
    slab_bytes = rows * bytes_per_row
    # Tiny slabs: a single full-extent block; per-step overhead would
    # dominate and there is nothing worth pipelining.
    if slab_bytes <= (1 << 20):
        return rows, 1
    cap_rows = max(sub, (target_block_bytes // bytes_per_row) // sub * sub)
    # Want >= 4 steps (input-DMA / compute / output-DMA overlap) and an even
    # step count so v7x's two TensorCores get a balanced "parallel" split.
    want = max(4, pl.cdiv(rows, cap_rows))
    if want % 2:
        want += 1
    tile_rows = cap_rows
    for steps in (want, want + 2, want + 4):
        tr = min(cap_rows, max(sub, _round_up(pl.cdiv(rows, steps), sub)))
        tile_rows = tr
        if pl.cdiv(rows, tr) % 2 == 0:
            break
    return tile_rows, pl.cdiv(rows, tile_rows)


def _add_weighted_slab(s1_2d, s2_2d, params, out_dtype):
    """Run the Pallas kernel over a lane-dense (rows, 128) slab."""
    rows = s1_2d.shape[0]
    itemsize = max(s1_2d.dtype.itemsize, s2_2d.dtype.itemsize,
                   jnp.dtype(out_dtype).itemsize)
    sub = max(_packed_sublanes(s1_2d.dtype), _packed_sublanes(s2_2d.dtype),
              _packed_sublanes(out_dtype))
    bytes_per_row = _LANE * itemsize

    # Size blocks / scoped-VMEM for the chip generation.
    if _vmem_capacity_bytes() >= (96 << 20):   # v5e / v6e: 128 MiB VMEM per TC
        target_block_bytes = 8 << 20           # 3 streams x 2 bufs = 48 MiB
        vmem_limit = 64 << 20
    else:                                      # v7x: only 64 MiB VMEM per TC
        target_block_bytes = 6 << 20           # 3 streams x 2 bufs = 36 MiB
        vmem_limit = 44 << 20

    tile_rows, n_steps = _select_tiling(rows, bytes_per_row, sub,
                                        target_block_bytes)

    return pl.pallas_call(
        _add_weighted_kernel,
        out_shape=jax.ShapeDtypeStruct((rows, _LANE), out_dtype),
        grid_spec=pl.GridSpec(
            grid=(n_steps,),
            in_specs=[
                pl.BlockSpec(memory_space=pltpu.MemorySpace.SMEM),
                pl.BlockSpec((tile_rows, _LANE), lambda i: (i, 0)),
                pl.BlockSpec((tile_rows, _LANE), lambda i: (i, 0)),
            ],
            out_specs=pl.BlockSpec((tile_rows, _LANE), lambda i: (i, 0)),
        ),
        compiler_params=pltpu.CompilerParams(
            dimension_semantics=("parallel",),
            vmem_limit_bytes=vmem_limit,
        ),
    )(params, s1_2d, s2_2d)


def add_weighted(src1, alpha: float, src2, beta: float, gamma: float = 0.0):
    if src1.shape != src2.shape:
        raise ValueError(
            f"`src1` and `src2` must have the same shape. "
            f"But got: {src1.shape} != {src2.shape}."
        )
    orig_shape = src1.shape

    # torch-style dtype promotion against python-float weights: floating
    # inputs keep their dtype, integer/bool inputs promote to float32.
    out_dtype = jnp.result_type(src1.dtype, src2.dtype)
    if not jnp.issubdtype(out_dtype, jnp.floating):
        out_dtype = jnp.promote_types(out_dtype, jnp.float32)

    params = jnp.asarray([alpha, beta, gamma], dtype=jnp.float32)

    total = math.prod(orig_shape) if orig_shape else 1
    if total == 0:
        return jnp.zeros(orig_shape, out_dtype)

    main = (total // _LANE) * _LANE   # 128-aligned prefix handled by Pallas
    tail = total - main               # <128-element ragged tail via plain jnp

    s1_flat = jnp.ravel(src1)
    s2_flat = jnp.ravel(src2)

    pieces = []
    if main > 0:
        if tail == 0:
            s1_main, s2_main = s1_flat, s2_flat   # no slice on the fast path
        else:
            s1_main, s2_main = s1_flat[:main], s2_flat[:main]
        rows = main // _LANE
        out_main = _add_weighted_slab(s1_main.reshape(rows, _LANE),
                                      s2_main.reshape(rows, _LANE),
                                      params, out_dtype)
        pieces.append(out_main.reshape(main))
    if tail > 0:
        t1 = s1_flat[main:].astype(jnp.float32)
        t2 = s2_flat[main:].astype(jnp.float32)
        pieces.append((t1 * params[0] + t2 * params[1] + params[2])
                      .astype(out_dtype))

    out_flat = pieces[0] if len(pieces) == 1 else jnp.concatenate(pieces)
    return out_flat.reshape(orig_shape)


class AddWeighted:
    """JAX/Pallas equivalent of the PyTorch AddWeighted module."""

    def __init__(self, alpha: float, beta: float, gamma: float):
        self.alpha = float(alpha)
        self.beta = float(beta)
        self.gamma = float(gamma)

    def __call__(self, src1, src2):
        return add_weighted(src1, self.alpha, src2, self.beta, self.gamma)


if __name__ == "__main__":
    key = jax.random.PRNGKey(0)
    k1, k2 = jax.random.split(key)

    # NCHW inputs, matching the PyTorch module's convention.
    B, C, H, W = 2, 4, 16, 16
    src1 = jax.random.uniform(k1, (B, C, H, W), dtype=jnp.float32)
    src2 = jax.random.uniform(k2, (B, C, H, W), dtype=jnp.float32)

    alpha, beta, gamma = 0.5, 0.5, 1.0
    module = AddWeighted(alpha, beta, gamma)
    out = jax.block_until_ready(module(src1, src2))
    ref = src1 * alpha + src2 * beta + gamma
    assert out.shape == (B, C, H, W), out.shape
    assert out.dtype == ref.dtype, out.dtype
    assert jnp.allclose(out, ref, atol=1e-6, rtol=1e-6), "mismatch vs reference"

    # Ragged (non-128-multiple) element counts and a multi-step (even) grid.
    for shape in [(1, 1, 5, 5), (3, 3, 37, 41), (4, 8, 128, 128)]:
        a = jax.random.uniform(k1, shape, dtype=jnp.float32)
        b = jax.random.uniform(k2, shape, dtype=jnp.float32)
        got = jax.block_until_ready(add_weighted(a, 0.25, b, 0.75, -2.0))
        want = a * 0.25 + b * 0.75 - 2.0
        assert got.shape == shape, got.shape
        assert jnp.allclose(got, want, atol=1e-6, rtol=1e-6), f"mismatch at {shape}"

    # bf16 inputs: arithmetic in f32, cast on store.
    a16 = jax.random.uniform(k1, (2, 4, 16, 16), dtype=jnp.bfloat16)
    b16 = jax.random.uniform(k2, (2, 4, 16, 16), dtype=jnp.bfloat16)
    got16 = jax.block_until_ready(add_weighted(a16, 0.5, b16, 0.5, 1.0))
    want16 = (a16.astype(jnp.float32) * 0.5 + b16.astype(jnp.float32) * 0.5
              + 1.0).astype(jnp.bfloat16)
    assert got16.dtype == jnp.bfloat16, got16.dtype
    assert jnp.allclose(got16.astype(jnp.float32), want16.astype(jnp.float32),
                        atol=1e-2, rtol=1e-2), "bf16 mismatch"

    print("KERNEL_OK")
</pallas_src>

<mosaic_0001>
module attributes {stable_mosaic.version = 11 : i64} {
  func.func @_add_weighted_kernel(%arg0: i32, %arg1: memref<3xf32, #tpu.memory_space<smem>>, %arg2: memref<16x128xf32, #tpu.memory_space<vmem>>, %arg3: memref<16x128xf32, #tpu.memory_space<vmem>>, %arg4: memref<16x128xf32, #tpu.memory_space<vmem>>) attributes {dimension_semantics = [#tpu.dimension_semantics<parallel>], iteration_bounds = array<i64: 1>, scalar_prefetch = 0 : i64, scratch_operands = 0 : i64, tpu.core_type = #tpu.core_type<tc>, window_params = [{transform_indices = @transform_0, window_bounds = array<i64: 3>}, {transform_indices = @transform_1, window_bounds = array<i64: 16, 128>}, {transform_indices = @transform_2, window_bounds = array<i64: 16, 128>}, {transform_indices = @transform_3, window_bounds = array<i64: 16, 128>}]} {
    %c0 = arith.constant 0 : index
    %0 = memref.load %arg1[%c0] : memref<3xf32, #tpu.memory_space<smem>>
    %c1 = arith.constant 1 : index
    %1 = memref.load %arg1[%c1] : memref<3xf32, #tpu.memory_space<smem>>
    %c2 = arith.constant 2 : index
    %2 = memref.load %arg1[%c2] : memref<3xf32, #tpu.memory_space<smem>>
    %c0_0 = arith.constant 0 : index
    %c0_1 = arith.constant 0 : index
    %3 = vector.load %arg2[%c0_0, %c0_1] : memref<16x128xf32, #tpu.memory_space<vmem>>, vector<16x128xf32>
    %c0_2 = arith.constant 0 : index
    %c0_3 = arith.constant 0 : index
    %4 = vector.load %arg3[%c0_2, %c0_3] : memref<16x128xf32, #tpu.memory_space<vmem>>, vector<16x128xf32>
    %5 = vector.broadcast %0 : f32 to vector<16x128xf32>
    %6 = arith.mulf %3, %5 : vector<16x128xf32>
    %7 = vector.broadcast %1 : f32 to vector<16x128xf32>
    %8 = arith.mulf %4, %7 : vector<16x128xf32>
    %9 = arith.addf %6, %8 : vector<16x128xf32>
    %10 = vector.broadcast %2 : f32 to vector<16x128xf32>
    %11 = arith.addf %9, %10 : vector<16x128xf32>
    %c0_4 = arith.constant 0 : index
    %c0_5 = arith.constant 0 : index
    %12 = vector.load %arg4[%c0_4, %c0_5] : memref<16x128xf32, #tpu.memory_space<vmem>>, vector<16x128xf32>
    tpu.vector_store %arg4[%c0_4, %c0_5], %11 {strides = array<i32>} : memref<16x128xf32, #tpu.memory_space<vmem>>, vector<16x128xf32>,
    return
  }
  func.func @transform_0(%arg0: i32) -> i32 {
    %c0_i32 = arith.constant 0 : i32
    %c0_i32_0 = arith.constant 0 : i32
    return %c0_i32 : i32
  }
  func.func @transform_1(%arg0: i32) -> (i32, i32) {
    %c0_i32 = arith.constant 0 : i32
    %c0_i32_0 = arith.constant 0 : i32
    return %arg0, %c0_i32 : i32, i32
  }
  func.func @transform_2(%arg0: i32) -> (i32, i32) {
    %c0_i32 = arith.constant 0 : i32
    %c0_i32_0 = arith.constant 0 : i32
    return %arg0, %c0_i32 : i32, i32
  }
  func.func @transform_3(%arg0: i32) -> (i32, i32) {
    %c0_i32 = arith.constant 0 : i32
    %c0_i32_0 = arith.constant 0 : i32
    return %arg0, %c0_i32 : i32, i32
  }
}

</mosaic_0001>

<llo_original>
// kernel: tpu_custom_call.1
$region0: #{tpu_custom_call.1}
  #allocation0 [shape = 'u32[]', space=smem, size = 0x4, offset = 0x4, fixed_abs, tag = 'smem constant byte address 0x4 - core index']
  #allocation1 [shape = 'u32[144,128]{1,0:T(1,128)}', space=vmem, size = 0x12000, scoped, tag = 'internal scratch']
  %s0 = inlined_call_operand.hbm [shape: f32[3], index: 0, kind: input, shape index: {}]
  %s1 = inlined_call_operand.hbm [shape: f32[16,128], index: 1, kind: input, shape index: {}]
  %s2 = inlined_call_operand.hbm [shape: f32[16,128], index: 2, kind: input, shape index: {}]
  %s3 = inlined_call_operand.hbm [shape: f32[16,128], index: 3, kind: output, shape index: {}]
  %s4 = sld [smem:[#allocation0]]
  $region34: #{tpu_custom_call.1} parent=0
    _
  %s6 = ssub.s32 1, %s4
  %s7 = scalar_select 0, %s6, %s4
  $region1: #{tpu_custom_call.1} parent=0
    #allocation2 [shape = 'u8[512]{0}', space=smem, size = 0x200, scoped, tag = 'input window, operand 0, single buffered']
    #allocation3 [shape = 's32[1]{0}', space=sflag, size = 0x4, scoped, tag = 'scoped memory for tpu_custom_call.1']
    #allocation4 [shape = 's32[1]{0}', space=sflag, size = 0x4, scoped, tag = 'scoped memory for tpu_custom_call.1']
    #allocation5 [shape = 's32[1]{0}', space=sflag, size = 0x4, scoped, tag = 'scoped memory for tpu_custom_call.1']
    #allocation6 [shape = 'u8[8192]{0}', space=vmem, size = 0x2000, scoped, tag = 'input window, operand 1, single buffered']
    #allocation7 [shape = 'u8[8192]{0}', space=vmem, size = 0x2000, scoped, tag = 'input window, operand 2, single buffered']
    #allocation8 [shape = 's32[1]{0}', space=sflag, size = 0x4, scoped, tag = 'scoped memory for tpu_custom_call.1']
    #allocation9 [shape = 'u8[8192]{0}', space=vmem, size = 0x2000, scoped, tag = 'output window, operand 0, single buffered']
    %8 = vsyncpa [#allocation5], 0
    %9 = vsyncpa [#allocation3], 0
    %10 = vsyncpa [#allocation8], 0
    %11 = vsyncpa [#allocation4], 0
    // Predicated region
    $region2: #{tpu_custom_call.1} parent=1 // pred_check
      _
    $region3: #{tpu_custom_call.1} parent=1 // pred_check_branch
      %13 = sbr.rel (0) target = $region5
    $region4: #{tpu_custom_call.1} parent=1 // pred_region
      %s15 = ssub.s32 16, 16
      %16 = vsyncadd [#allocation5], %s15
      %19 = dma.hbm_to_smem %s0, 16, [#allocation2], [#allocation5]
    $region5: #{tpu_custom_call.1} parent=1 // pred_fallthru
      _
    // Predicated region
    $region6: #{tpu_custom_call.1} parent=1 // pred_check
      _
    $region7: #{tpu_custom_call.1} parent=1 // pred_check_branch
      %21 = sbr.rel (0) target = $region9
    $region8: #{tpu_custom_call.1} parent=1 // pred_region
      %s23 = ssub.s32 256, 256
      %24 = vsyncadd [#allocation3], %s23
      %s25 = sshll.u32 [#allocation6], 4
      %s26 = int_to_ptr.vmem [resolvable:$true] %s25
      %31 = dma.hbm_to_vmem [thread:$0]  %s1, 256, %s26, [#allocation3], 128, 128, 8
    $region9: #{tpu_custom_call.1} parent=1 // pred_fallthru
      _
    // Predicated region
    $region10: #{tpu_custom_call.1} parent=1 // pred_check
      _
    $region11: #{tpu_custom_call.1} parent=1 // pred_check_branch
      %33 = sbr.rel (0) target = $region13
    $region12: #{tpu_custom_call.1} parent=1 // pred_region
      %s35 = ssub.s32 256, 256
      %36 = vsyncadd [#allocation8], %s35
      %s37 = sshll.u32 [#allocation7], 4
      %s38 = int_to_ptr.vmem [resolvable:$true] %s37
      %43 = dma.hbm_to_vmem [thread:$0]  %s2, 256, %s38, [#allocation8], 128, 128, 8
    $region13: #{tpu_custom_call.1} parent=1 // pred_fallthru
      _
    // Predicated region
    $region14: #{tpu_custom_call.1} parent=1 // pred_check
      _
    $region15: #{tpu_custom_call.1} parent=1 // pred_check_branch
      %45 = sbr.rel (0) target = $region17
    $region16: #{tpu_custom_call.1} parent=1 // pred_region
      %46 = dma.done [#allocation5], 16
    $region17: #{tpu_custom_call.1} parent=1 // pred_fallthru
      _
    // Predicated region
    $region18: #{tpu_custom_call.1} parent=1 // pred_check
      _
    $region19: #{tpu_custom_call.1} parent=1 // pred_check_branch
      %48 = sbr.rel (0) target = $region21
    $region20: #{tpu_custom_call.1} parent=1 // pred_region
      %49 = dma.done [#allocation3], 256
    $region21: #{tpu_custom_call.1} parent=1 // pred_fallthru
      _
    // Predicated region
    $region22: #{tpu_custom_call.1} parent=1 // pred_check
      _
    $region23: #{tpu_custom_call.1} parent=1 // pred_check_branch
      %51 = sbr.rel (0) target = $region25
    $region24: #{tpu_custom_call.1} parent=1 // pred_region
      %52 = dma.done [#allocation8], 256
    $region25: #{tpu_custom_call.1} parent=1 // pred_fallthru
      _
    %53 = sfence
    %s54 = sld [smem:[#allocation2]]
    %s55 = sld [smem:[#allocation2 + $0x1]]
    %s56 = sld [smem:[#allocation2 + $0x2]]
    %v57 = vld [vmem:[#allocation6] sm:$0xff]
    %v58 = vld [vmem:[#allocation6 + $0x8] sm:$0xff]
    %v59 = vld [vmem:[#allocation7] sm:$0xff]
    %v60 = vld [vmem:[#allocation7 + $0x8] sm:$0xff]
    %v61 = vstv %s54
    %v62 = vmul.f32 %v57, %v61
    %v63 = vmul.f32 %v58, %v61
    %v64 = vstv %s55
    %v65 = vmul.f32 %v59, %v64
    %v66 = vmul.f32 %v60, %v64
    %v67 = vadd.f32 %v62, %v65
    %v68 = vadd.f32 %v63, %v66
    %v69 = vstv %s56
    %v70 = vadd.f32 %v67, %v69
    %v71 = vadd.f32 %v68, %v69
    %72 = vst [vmem:[#allocation9] sm:$0xff] %v70
    %73 = vst [vmem:[#allocation9 + $0x8] sm:$0xff] %v71
    // Predicated region
    $region26: #{tpu_custom_call.1} parent=1 // pred_check
      _
    $region27: #{tpu_custom_call.1} parent=1 // pred_check_branch
      %75 = sbr.rel (0) target = $region29
    $region28: #{tpu_custom_call.1} parent=1 // pred_region
      %s77 = ssub.s32 256, 256
      %78 = vsyncadd [#allocation4], %s77
      %s79 = sshll.u32 [#allocation9], 4
      %s80 = int_to_ptr.vmem [resolvable:$true] %s79
      %85 = dma.vmem_to_hbm [thread:$0]  %s80, 256, %s3, [#allocation4], 128, 128, 8
    $region29: #{tpu_custom_call.1} parent=1 // pred_fallthru
      _
    // Predicated region
    $region30: #{tpu_custom_call.1} parent=1 // pred_check
      _
    $region31: #{tpu_custom_call.1} parent=1 // pred_check_branch
      %87 = sbr.rel (0) target = $region33
    $region32: #{tpu_custom_call.1} parent=1 // pred_region
      %88 = dma.done [#allocation4], 256
    $region33: #{tpu_custom_call.1} parent=1 // pred_fallthru
      _
    %89 = vsyncpa [#allocation3], 1
    %90 = vsyncpa [#allocation8], 1
    %91 = vsyncpa [#allocation4], 1
    %92 = vsyncpa [#allocation5], 1

</llo_original>
